<compile_context>
chip_gen: v7x
topology: tpu7x:2x2x1
jax: 0.10.0
libtpu: 0.0.40
codegen_flags: <defaults>
</compile_context>

<pallas_src>
import jax
import jax.numpy as jnp
from jax.experimental import pallas as pl
from jax.experimental.pallas import tpu as pltpu

EMBED_DIM = 640    # ESM-2 (t12) embedding width, fc_mi/fc_mr in_features
PROJ_DIM = 32      # fc_mi/fc_mr out_features
SEQ_LEN = 30       # 64 * 30 = 1920 = fc1.in_features
HIDDEN = 30        # hidden_units
OUT = 2            # fc2 out_features
VOCAB = 33         # synthetic token vocabulary for the embedding stand-in
VOCAB_PAD = 128    # table rows zero-padded to a full lane width (exact, free)


# ------------------------------ fused kernel -------------------------------

def _fused_forward_kernel(tok_ref, ws_ref, bcat_ref, wt_ref, sel_ref, bc_ref, out_ref):
    """Whole batch in one invocation; every intermediate stays in VMEM/vregs.

    tok_ref  : (B*L, 2) int32        col 0 = mi token id, col 1 = mr token id
    ws_ref   : (256, 64) f32         block-diag [table@W_mi | 0 ; 0 | table@W_mr]
    bcat_ref : (1, 64) f32           [b_mi | b_mr]
    wt_ref   : (OUT, B*L, 64) f32    fc1∘fc2 folded weight, permutation folded in,
                                     tiled over the batch along rows
    sel_ref  : (B, B*L) f32          segment-sum matrix (1 where row belongs to batch b)
    bc_ref   : (1, OUT) f32          b1 @ W2 + b2
    out_ref  : (B, OUT) f32
    """
    n = tok_ref.shape[0]          # B*L
    k2 = ws_ref.shape[0]          # 2 * VOCAB_PAD = 256
    half = k2 // 2

    # --- shared one-hot: token gather + both 640->32 projections as ONE matmul ----
    lane = jax.lax.broadcasted_iota(jnp.int32, (n, k2), 1)
    tok_mi = tok_ref[:, 0:1]                                  # (N, 1)
    tok_mr = tok_ref[:, 1:2]
    onehot = jnp.logical_or(lane == tok_mi,
                            lane == tok_mr + half).astype(jnp.float32)   # (N, 256)

    h = jnp.maximum(
        jnp.dot(onehot, ws_ref[...], preferred_element_type=jnp.float32)
        + bcat_ref[...],
        0.0)                                                  # (N, 64) = ReLU branches

    # --- fc1 + fc2 (folded): y[b,o] = sum_{l,c} h[b*L+l, c] * Wc[o, l, c] + bc[o] ---
    cols = []
    for o in range(OUT):
        g = jnp.dot(sel_ref[...], h * wt_ref[o],
                    preferred_element_type=jnp.float32)       # (B, 64)
        cols.append(jnp.sum(g, axis=1, keepdims=True))        # (B, 1)
    out_ref[...] = jnp.concatenate(cols, axis=1) + bc_ref[...]


def fused_forward(x_mirna, x_mrna, packed):
    B, L = x_mirna.shape
    assert L == SEQ_LEN, (B, L)
    n = B * L
    # lane-packed token block: one tiny DMA for the whole batch (tokens read once)
    tok = jnp.stack([x_mirna.astype(jnp.int32), x_mrna.astype(jnp.int32)],
                    axis=-1).reshape(n, 2)
    # tail weight tiled over batch rows + segment-sum selection matrix (both tiny)
    wt = jnp.tile(packed["wc3"], (1, B, 1))                          # (OUT, B*L, 64)
    sel = jnp.repeat(jnp.eye(B, dtype=jnp.float32), L, axis=1)       # (B, B*L)

    vmem = pl.BlockSpec(memory_space=pltpu.MemorySpace.VMEM)
    return pl.pallas_call(
        _fused_forward_kernel,
        out_shape=jax.ShapeDtypeStruct((B, OUT), jnp.float32),
        in_specs=[vmem] * 6,
        out_specs=vmem,
    )(tok, packed["ws"], packed["bcat"], wt, sel, packed["bc"])


# ------------------------------ model wrapper ------------------------------

def init_params(key):
    ks = jax.random.split(key, 9)
    scale = 0.02
    return {
        # deterministic stand-in for the ESM-2 `fm_model` token embeddings
        "embed_table": jax.random.normal(ks[0], (VOCAB, EMBED_DIM), jnp.float32) * scale,
        # fc_mi / fc_mr (stored as (in, out); torch Linear applies x @ W.T + b)
        "w_mi": jax.random.normal(ks[1], (EMBED_DIM, PROJ_DIM), jnp.float32) * scale,
        "b_mi": jax.random.normal(ks[2], (1, PROJ_DIM), jnp.float32) * scale,
        "w_mr": jax.random.normal(ks[3], (EMBED_DIM, PROJ_DIM), jnp.float32) * scale,
        "b_mr": jax.random.normal(ks[4], (1, PROJ_DIM), jnp.float32) * scale,
        # fc1 / fc2
        "w1": jax.random.normal(ks[5], (2 * PROJ_DIM * SEQ_LEN, HIDDEN), jnp.float32) * scale,
        "b1": jax.random.normal(ks[6], (1, HIDDEN), jnp.float32) * scale,
        "w2": jax.random.normal(ks[7], (HIDDEN, OUT), jnp.float32) * scale,
        "b2": jax.random.normal(ks[8], (1, OUT), jnp.float32) * scale,
    }


def pack_params(params):
    """One-time host-side algebraic folds (all exact — no nonlinearity crossed):
       * embedding table folded into both branch weights, stacked block-diagonally,
       * fc2 folded into fc1, with PyTorch's transpose/cat/view permutation folded in.
       Token ids >= VOCAB would map to a zero embedding (nn.Embedding would raise)."""
    hp = jax.lax.Precision.HIGHEST
    table_pad = jnp.zeros((VOCAB_PAD, EMBED_DIM), jnp.float32).at[:VOCAB].set(
        params["embed_table"])
    t_mi = jnp.dot(table_pad, params["w_mi"], precision=hp)          # (128, 32)
    t_mr = jnp.dot(table_pad, params["w_mr"], precision=hp)          # (128, 32)
    z = jnp.zeros((VOCAB_PAD, PROJ_DIM), jnp.float32)
    ws = jnp.concatenate([jnp.concatenate([t_mi, z], axis=1),
                          jnp.concatenate([z, t_mr], axis=1)], axis=0)   # (256, 64)
    bcat = jnp.concatenate([params["b_mi"], params["b_mr"]], axis=1)     # (1, 64)
    # fc1 flatten index k = c*L + l (channels-major, from transpose(1,2)+cat+view)
    wfold = jnp.dot(params["w1"], params["w2"], precision=hp)            # (1920, OUT)
    wc3 = jnp.transpose(wfold.reshape(2 * PROJ_DIM, SEQ_LEN, OUT),
                        (2, 1, 0))                                       # (OUT, L, 64)
    bc = jnp.dot(params["b1"], params["w2"], precision=hp) + params["b2"]  # (1, OUT)
    return {"ws": ws, "bcat": bcat, "wc3": wc3, "bc": bc}


def get_embed(params, tokens):
    # stand-in for the frozen ESM-2 forward (see TODO(synk) at top)
    return params["embed_table"][tokens]          # (B, L, 640)


@jax.jit
def target_fm2_forward(packed, x_mirna, x_mrna):
    return fused_forward(x_mirna.astype(jnp.int32), x_mrna.astype(jnp.int32), packed)


def reference_forward(params, x_mirna, x_mrna):
    """Pure-JAX reference mirroring the PyTorch forward (uses the raw params)."""
    hp = jax.lax.Precision.HIGHEST
    def branch(tok, w, b):
        emb = get_embed(params, tok)
        proj = jnp.maximum(jnp.dot(emb, w, precision=hp) + b, 0.0)   # (B, L, 32)
        return jnp.transpose(proj, (0, 2, 1))                        # (B, 32, L)
    h = jnp.concatenate(
        [branch(x_mirna, params["w_mi"], params["b_mi"]),
         branch(x_mrna, params["w_mr"], params["b_mr"])], axis=1)
    h = h.reshape(h.shape[0], -1)                                    # (B, 1920)
    h = jnp.dot(h, params["w1"], precision=hp) + params["b1"]
    return jnp.dot(h, params["w2"], precision=hp) + params["b2"]


# ----------------------------------- main -----------------------------------

if __name__ == "__main__":
    key = jax.random.PRNGKey(0)
    k_par, k_mi, k_mr = jax.random.split(key, 3)
    params = init_params(k_par)
    packed = pack_params(params)

    B = 2
    x_mirna = jax.random.randint(k_mi, (B, SEQ_LEN), 0, VOCAB, dtype=jnp.int32)
    x_mrna = jax.random.randint(k_mr, (B, SEQ_LEN), 0, VOCAB, dtype=jnp.int32)

    y = target_fm2_forward(packed, x_mirna, x_mrna)
    y = jax.block_until_ready(y)

    y_ref = reference_forward(params, x_mirna, x_mrna)
    assert y.shape == (B, OUT), y.shape
    assert jnp.allclose(y, y_ref, atol=1e-3, rtol=1e-3), (y, y_ref)

    print("KERNEL_OK")
</pallas_src>

<mosaic_0001>
module attributes {stable_mosaic.version = 11 : i64} {
  func.func @_fused_forward_kernel(%arg0: memref<60x2xi32, #tpu.memory_space<vmem>>, %arg1: memref<256x64xf32, #tpu.memory_space<vmem>>, %arg2: memref<1x64xf32, #tpu.memory_space<vmem>>, %arg3: memref<2x60x64xf32, #tpu.memory_space<vmem>>, %arg4: memref<2x60xf32, #tpu.memory_space<vmem>>, %arg5: memref<1x2xf32, #tpu.memory_space<vmem>>, %arg6: memref<2x2xf32, #tpu.memory_space<vmem>>) attributes {dimension_semantics = [], scalar_prefetch = 0 : i64, scratch_operands = 0 : i64, tpu.core_type = #tpu.core_type<tc>} {
    %0 = tpu.iota {dimensions = array<i32: 1>} : vector<60x256xi32>
    %c0 = arith.constant 0 : index
    %c0_0 = arith.constant 0 : index
    %1 = vector.load %arg0[%c0, %c0_0] : memref<60x2xi32, #tpu.memory_space<vmem>>, vector<60x1xi32>
    %c0_1 = arith.constant 0 : index
    %c1 = arith.constant 1 : index
    %2 = vector.load %arg0[%c0_1, %c1] : memref<60x2xi32, #tpu.memory_space<vmem>>, vector<60x1xi32>
    %3 = vector.broadcast %1 : vector<60x1xi32> to vector<60x256xi32>
    %4 = arith.cmpi eq, %0, %3 : vector<60x256xi32>
    %c128_i32 = arith.constant 128 : i32
    %5 = vector.broadcast %c128_i32 : i32 to vector<60x1xi32>
    %6 = arith.addi %2, %5 : vector<60x1xi32>
    %7 = vector.broadcast %6 : vector<60x1xi32> to vector<60x256xi32>
    %8 = arith.cmpi eq, %0, %7 : vector<60x256xi32>
    %9 = arith.ori %4, %8 : vector<60x256xi1>
    %10 = arith.extui %9 : vector<60x256xi1> to vector<60x256xi32>
    %11 = arith.sitofp %10 : vector<60x256xi32> to vector<60x256xf32>
    %c0_2 = arith.constant 0 : index
    %c0_3 = arith.constant 0 : index
    %12 = vector.load %arg1[%c0_2, %c0_3] : memref<256x64xf32, #tpu.memory_space<vmem>>, vector<256x64xf32>
    %cst = arith.constant dense<0.000000e+00> : vector<60x64xf32>
    %13 = tpu.matmul %11, %12, %cst {dimension_numbers = #tpu.dot_dimension_numbers<[1], [0], [0], [1], [0, 0, 1, 1], [], []>} : vector<60x256xf32>, vector<256x64xf32>, vector<60x64xf32> -> vector<60x64xf32>
    %c0_4 = arith.constant 0 : index
    %c0_5 = arith.constant 0 : index
    %14 = vector.load %arg2[%c0_4, %c0_5] : memref<1x64xf32, #tpu.memory_space<vmem>>, vector<1x64xf32>
    %15 = vector.broadcast %14 : vector<1x64xf32> to vector<60x64xf32>
    %16 = arith.addf %13, %15 : vector<60x64xf32>
    %cst_6 = arith.constant 0.000000e+00 : f32
    %17 = vector.broadcast %cst_6 : f32 to vector<60x64xf32>
    %18 = arith.maximumf %16, %17 : vector<60x64xf32>
    %c0_7 = arith.constant 0 : index
    %c0_8 = arith.constant 0 : index
    %19 = vector.load %arg4[%c0_7, %c0_8] : memref<2x60xf32, #tpu.memory_space<vmem>>, vector<2x60xf32>
    %c0_9 = arith.constant 0 : index
    %c0_10 = arith.constant 0 : index
    %c0_11 = arith.constant 0 : index
    %20 = vector.load %arg3[%c0_9, %c0_10, %c0_11] : memref<2x60x64xf32, #tpu.memory_space<vmem>>, vector<1x60x64xf32>
    %21 = vector.shape_cast %20 : vector<1x60x64xf32> to vector<60x64xf32>
    %22 = arith.mulf %18, %21 : vector<60x64xf32>
    %cst_12 = arith.constant dense<0.000000e+00> : vector<2x64xf32>
    %23 = tpu.matmul %19, %22, %cst_12 {dimension_numbers = #tpu.dot_dimension_numbers<[1], [0], [0], [1], [0, 0, 1, 1], [], []>} : vector<2x60xf32>, vector<60x64xf32>, vector<2x64xf32> -> vector<2x64xf32>
    %cst_13 = arith.constant dense<0.000000e+00> : vector<2xf32>
    %24 = vector.multi_reduction <add>, %23, %cst_13 [1] : vector<2x64xf32> to vector<2xf32>
    %25 = vector.shape_cast %24 : vector<2xf32> to vector<2x1xf32>
    %c0_14 = arith.constant 0 : index
    %c0_15 = arith.constant 0 : index
    %26 = vector.load %arg4[%c0_14, %c0_15] : memref<2x60xf32, #tpu.memory_space<vmem>>, vector<2x60xf32>
    %c1_16 = arith.constant 1 : index
    %c0_17 = arith.constant 0 : index
    %c0_18 = arith.constant 0 : index
    %27 = vector.load %arg3[%c1_16, %c0_17, %c0_18] : memref<2x60x64xf32, #tpu.memory_space<vmem>>, vector<1x60x64xf32>
    %28 = vector.shape_cast %27 : vector<1x60x64xf32> to vector<60x64xf32>
    %29 = arith.mulf %18, %28 : vector<60x64xf32>
    %cst_19 = arith.constant dense<0.000000e+00> : vector<2x64xf32>
    %30 = tpu.matmul %26, %29, %cst_19 {dimension_numbers = #tpu.dot_dimension_numbers<[1], [0], [0], [1], [0, 0, 1, 1], [], []>} : vector<2x60xf32>, vector<60x64xf32>, vector<2x64xf32> -> vector<2x64xf32>
    %cst_20 = arith.constant dense<0.000000e+00> : vector<2xf32>
    %31 = vector.multi_reduction <add>, %30, %cst_20 [1] : vector<2x64xf32> to vector<2xf32>
    %32 = vector.shape_cast %31 : vector<2xf32> to vector<2x1xf32>
    %33 = tpu.concatenate %25, %32 in 1 : vector<2x1xf32>, vector<2x1xf32> -> vector<2x2xf32>
    %c0_21 = arith.constant 0 : index
    %c0_22 = arith.constant 0 : index
    %34 = vector.load %arg5[%c0_21, %c0_22] : memref<1x2xf32, #tpu.memory_space<vmem>>, vector<1x2xf32>
    %35 = vector.broadcast %34 : vector<1x2xf32> to vector<2x2xf32>
    %36 = arith.addf %33, %35 : vector<2x2xf32>
    %c0_23 = arith.constant 0 : index
    %c0_24 = arith.constant 0 : index
    %37 = vector.load %arg6[%c0_23, %c0_24] : memref<2x2xf32, #tpu.memory_space<vmem>>, vector<2x2xf32>
    tpu.vector_store %arg6[%c0_23, %c0_24], %36 {strides = array<i32>} : memref<2x2xf32, #tpu.memory_space<vmem>>, vector<2x2xf32>,
    return
  }
}

</mosaic_0001>

<llo_original>
// kernel: target_fm2_forward.1
$region0: #{target_fm2_forward.1}
  #allocation0 [shape = 'u32[]', space=smem, size = 0x4, offset = 0x4, fixed_abs, tag = 'smem constant byte address 0x4 - core index']
  #allocation1 [shape = 'u32[144,128]{1,0:T(1,128)}', space=vmem, size = 0x12000, scoped, tag = 'internal scratch']
  %s0 = inlined_call_operand.vmem [shape: s32[60,2], index: 0, kind: input, shape index: {}]
  %s1 = inlined_call_operand.vmem [shape: f32[256,64], index: 1, kind: input, shape index: {}]
  %s2 = inlined_call_operand.vmem [shape: f32[1,64], index: 2, kind: input, shape index: {}]
  %s3 = inlined_call_operand.vmem [shape: f32[2,60,64], index: 3, kind: input, shape index: {}]
  %s4 = inlined_call_operand.vmem [shape: f32[2,60], index: 4, kind: input, shape index: {}]
  %s5 = inlined_call_operand.vmem [shape: f32[1,2], index: 5, kind: input, shape index: {}]
  %s6 = inlined_call_operand.hbm [shape: f32[2,2], index: 6, kind: output, shape index: {}]
  %s7 = sld [smem:[#allocation0]]
  $region34: #{target_fm2_forward.1} parent=0
    _
  %s9 = ssub.s32 1, %s7
  %s10 = scalar_select 0, %s9, %s7
  $region1: #{target_fm2_forward.1} parent=0
    #allocation2 [shape = 'u8[1024]{0}', space=vmem, size = 0x400, scoped, tag = 'output window, operand 0, single buffered']
    #allocation3 [shape = 's32[1]{0}', space=sflag, size = 0x4, scoped, tag = 'scoped memory for target_fm2_forward.1']
    %11 = vsyncpa [#allocation3], 0
    // Predicated region
    $region2: #{target_fm2_forward.1} parent=1 // pred_check
      _
    $region3: #{target_fm2_forward.1} parent=1 // pred_check_branch
      %13 = sbr.rel (0) target = $region5
    $region4: #{target_fm2_forward.1} parent=1 // pred_region
      _
    $region5: #{target_fm2_forward.1} parent=1 // pred_fallthru
      _
    // Predicated region
    $region6: #{target_fm2_forward.1} parent=1 // pred_check
      _
    $region7: #{target_fm2_forward.1} parent=1 // pred_check_branch
      %15 = sbr.rel (0) target = $region9
    $region8: #{target_fm2_forward.1} parent=1 // pred_region
      _
    $region9: #{target_fm2_forward.1} parent=1 // pred_fallthru
      _
    // Predicated region
    $region10: #{target_fm2_forward.1} parent=1 // pred_check
      _
    $region11: #{target_fm2_forward.1} parent=1 // pred_check_branch
      %17 = sbr.rel (0) target = $region13
    $region12: #{target_fm2_forward.1} parent=1 // pred_region
      _
    $region13: #{target_fm2_forward.1} parent=1 // pred_fallthru
      _
    // Predicated region
    $region14: #{target_fm2_forward.1} parent=1 // pred_check
      _
    $region15: #{target_fm2_forward.1} parent=1 // pred_check_branch
      %19 = sbr.rel (0) target = $region17
    $region16: #{target_fm2_forward.1} parent=1 // pred_region
      _
    $region17: #{target_fm2_forward.1} parent=1 // pred_fallthru
      _
    // Predicated region
    $region18: #{target_fm2_forward.1} parent=1 // pred_check
      _
    $region19: #{target_fm2_forward.1} parent=1 // pred_check_branch
      %21 = sbr.rel (0) target = $region21
    $region20: #{target_fm2_forward.1} parent=1 // pred_region
      _
    $region21: #{target_fm2_forward.1} parent=1 // pred_fallthru
      _
    // Predicated region
    $region22: #{target_fm2_forward.1} parent=1 // pred_check
      _
    $region23: #{target_fm2_forward.1} parent=1 // pred_check_branch
      %23 = sbr.rel (0) target = $region25
    $region24: #{target_fm2_forward.1} parent=1 // pred_region
      _
    $region25: #{target_fm2_forward.1} parent=1 // pred_fallthru
      _
    %v24 = vlaneseq
    %v25 = vand.u32 %v24, 127
    %v26 = vadd.s32 %v25, 128
    %v27 = vld [vmem:[%s0] sm:$0xff]
    %v28 = vld [vmem:[%s0 + $0x8] sm:$0xff]
    %v29 = vld [vmem:[%s0 + $0x10] sm:$0xff]
    %v30 = vld [vmem:[%s0 + $0x18] sm:$0xff]
    %v31 = vld [vmem:[%s0 + $0x20] sm:$0xff]
    %v32 = vld [vmem:[%s0 + $0x28] sm:$0xff]
    %v33 = vld [vmem:[%s0 + $0x30] sm:$0xff]
    %v34 = vld [vmem:[%s0 + $0x38] sm:$0xf]
    %35 = vset.pattern.permute.xlu0 0
    %36 = vperm.xlu0 %35, %v27
    %v37 = vpop.permute.xlu0 %36
    %38 = vset.pattern.permute.xlu0 0
    %39 = vperm.xlu0 %38, %v28
    %v40 = vpop.permute.xlu0 %39
    %41 = vset.pattern.permute.xlu0 0
    %42 = vperm.xlu0 %41, %v29
    %v43 = vpop.permute.xlu0 %42
    %44 = vset.pattern.permute.xlu0 0
    %45 = vperm.xlu0 %44, %v30
    %v46 = vpop.permute.xlu0 %45
    %47 = vset.pattern.permute.xlu0 0
    %48 = vperm.xlu0 %47, %v31
    %v49 = vpop.permute.xlu0 %48
    %50 = vset.pattern.permute.xlu0 0
    %51 = vperm.xlu0 %50, %v32
    %v52 = vpop.permute.xlu0 %51
    %53 = vset.pattern.permute.xlu0 0
    %54 = vperm.xlu0 %53, %v33
    %v55 = vpop.permute.xlu0 %54
    %56 = vset.pattern.permute.xlu0 0
    %57 = vperm.xlu0 %56, %v34
    %v58 = vpop.permute.xlu0 %57
    %vm59 = vcmp.eq.s32.totalorder %v25, %v37
    %vm60 = vcmp.eq.s32.totalorder %v26, %v37
    %vm61 = vcmp.eq.s32.totalorder %v25, %v40
    %vm62 = vcmp.eq.s32.totalorder %v26, %v40
    %vm63 = vcmp.eq.s32.totalorder %v25, %v43
    %vm64 = vcmp.eq.s32.totalorder %v26, %v43
    %vm65 = vcmp.eq.s32.totalorder %v25, %v46
    %vm66 = vcmp.eq.s32.totalorder %v26, %v46
    %vm67 = vcmp.eq.s32.totalorder %v25, %v49
    %vm68 = vcmp.eq.s32.totalorder %v26, %v49
    %vm69 = vcmp.eq.s32.totalorder %v25, %v52
    %vm70 = vcmp.eq.s32.totalorder %v26, %v52
    %vm71 = vcmp.eq.s32.totalorder %v25, %v55
    %vm72 = vcmp.eq.s32.totalorder %v26, %v55
    %vm73 = vcmp.eq.s32.totalorder %v25, %v58
    %vm74 = vcmp.eq.s32.totalorder %v26, %v58
    %v75 = vadd.s32 %v27, 128
    %v76 = vadd.s32 %v28, 128
    %v77 = vadd.s32 %v29, 128
    %v78 = vadd.s32 %v30, 128
    %v79 = vadd.s32 %v31, 128
    %v80 = vadd.s32 %v32, 128
    %v81 = vadd.s32 %v33, 128
    %v82 = vadd.s32 %v34, 128
    %83 = vset.pattern.permute.xlu0 1
    %84 = vperm.xlu0 %83, %v75
    %v85 = vpop.permute.xlu0 %84
    %86 = vset.pattern.permute.xlu0 1
    %87 = vperm.xlu0 %86, %v76
    %v88 = vpop.permute.xlu0 %87
    %89 = vset.pattern.permute.xlu0 1
    %90 = vperm.xlu0 %89, %v77
    %v91 = vpop.permute.xlu0 %90
    %92 = vset.pattern.permute.xlu0 1
    %93 = vperm.xlu0 %92, %v78
    %v94 = vpop.permute.xlu0 %93
    %95 = vset.pattern.permute.xlu0 1
    %96 = vperm.xlu0 %95, %v79
    %v97 = vpop.permute.xlu0 %96
    %98 = vset.pattern.permute.xlu0 1
    %99 = vperm.xlu0 %98, %v80
    %v100 = vpop.permute.xlu0 %99
    %101 = vset.pattern.permute.xlu0 1
    %102 = vperm.xlu0 %101, %v81
    %v103 = vpop.permute.xlu0 %102
    %104 = vset.pattern.permute.xlu0 1
    %105 = vperm.xlu0 %104, %v82
    %v106 = vpop.permute.xlu0 %105
    %vm107 = vcmp.eq.s32.totalorder %v25, %v85
    %vm108 = vcmp.eq.s32.totalorder %v26, %v85
    %vm109 = vcmp.eq.s32.totalorder %v25, %v88
    %vm110 = vcmp.eq.s32.totalorder %v26, %v88
    %vm111 = vcmp.eq.s32.totalorder %v25, %v91
    %vm112 = vcmp.eq.s32.totalorder %v26, %v91
    %vm113 = vcmp.eq.s32.totalorder %v25, %v94
    %vm114 = vcmp.eq.s32.totalorder %v26, %v94
    %vm115 = vcmp.eq.s32.totalorder %v25, %v97
    %vm116 = vcmp.eq.s32.totalorder %v26, %v97
    %vm117 = vcmp.eq.s32.totalorder %v25, %v100
    %vm118 = vcmp.eq.s32.totalorder %v26, %v100
    %vm119 = vcmp.eq.s32.totalorder %v25, %v103
    %vm120 = vcmp.eq.s32.totalorder %v26, %v103
    %vm121 = vcmp.eq.s32.totalorder %v25, %v106
    %vm122 = vcmp.eq.s32.totalorder %v26, %v106
    %vm123 = vmor %vm59, %vm107
    %vm124 = vmor %vm60, %vm108
    %vm125 = vmor %vm61, %vm109
    %vm126 = vmor %vm62, %vm110
    %vm127 = vmor %vm63, %vm111
    %vm128 = vmor %vm64, %vm112
    %vm129 = vmor %vm65, %vm113
    %vm130 = vmor %vm66, %vm114
    %vm131 = vmor %vm67, %vm115
    %vm132 = vmor %vm68, %vm116
    %vm133 = vmor %vm69, %vm117
    %vm134 = vmor %vm70, %vm118
    %vm135 = vmor %vm71, %vm119
    %vm136 = vmor %vm72, %vm120
    %vm137 = vmor %vm73, %vm121
    %vm138 = vmor %vm74, %vm122
    %v139 = vsel %vm123, 1, 0
    %v140 = vsel %vm124, 1, 0
    %v141 = vsel %vm125, 1, 0
    %v142 = vsel %vm126, 1, 0
    %v143 = vsel %vm127, 1, 0
    %v144 = vsel %vm128, 1, 0
    %v145 = vsel %vm129, 1, 0
    %v146 = vsel %vm130, 1, 0
    %v147 = vsel %vm131, 1, 0
    %v148 = vsel %vm132, 1, 0
    %v149 = vsel %vm133, 1, 0
    %v150 = vsel %vm134, 1, 0
    %v151 = vsel %vm135, 1, 0
    %v152 = vsel %vm136, 1, 0
    %v153 = vsel %vm137, 1, 0
    %v154 = vsel %vm138, 1, 0
    %v155 = vcvt.s32.f32 %v139
    %v156 = vcvt.s32.f32 %v140
    %v157 = vcvt.s32.f32 %v141
    %v158 = vcvt.s32.f32 %v142
    %v159 = vcvt.s32.f32 %v143
    %v160 = vcvt.s32.f32 %v144
    %v161 = vcvt.s32.f32 %v145
    %v162 = vcvt.s32.f32 %v146
    %v163 = vcvt.s32.f32 %v147
    %v164 = vcvt.s32.f32 %v148
    %v165 = vcvt.s32.f32 %v149
    %v166 = vcvt.s32.f32 %v150
    %v167 = vcvt.s32.f32 %v151
    %v168 = vcvt.s32.f32 %v152
    %v169 = vcvt.s32.f32 %v153
    %v170 = vcvt.s32.f32 %v154
    %v171 = vld [vmem:[%s1] sm:$0xff]
    %v172 = vld [vmem:[%s1 + $0x8] sm:$0xff]
    %v173 = vld [vmem:[%s1 + $0x10] sm:$0xff]
    %v174 = vld [vmem:[%s1 + $0x18] sm:$0xff]
    %v175 = vld [vmem:[%s1 + $0x20] sm:$0xff]
    %v176 = vld [vmem:[%s1 + $0x28] sm:$0xff]
    %v177 = vld [vmem:[%s1 + $0x30] sm:$0xff]
    %v178 = vld [vmem:[%s1 + $0x38] sm:$0xff]
    %v179 = vld [vmem:[%s1 + $0x40] sm:$0xff]
    %v180 = vld [vmem:[%s1 + $0x48] sm:$0xff]
    %v181 = vld [vmem:[%s1 + $0x50] sm:$0xff]
    %v182 = vld [vmem:[%s1 + $0x58] sm:$0xff]
    %v183 = vld [vmem:[%s1 + $0x60] sm:$0xff]
    %v184 = vld [vmem:[%s1 + $0x68] sm:$0xff]
    %v185 = vld [vmem:[%s1 + $0x70] sm:$0xff]
    %v186 = vld [vmem:[%s1 + $0x78] sm:$0xff]
    %v187 = vld [vmem:[%s1 + $0x80] sm:$0xff]
    %v188 = vld [vmem:[%s1 + $0x88] sm:$0xff]
    %v189 = vld [vmem:[%s1 + $0x90] sm:$0xff]
    %v190 = vld [vmem:[%s1 + $0x98] sm:$0xff]
    %v191 = vld [vmem:[%s1 + $0xa0] sm:$0xff]
    %v192 = vld [vmem:[%s1 + $0xa8] sm:$0xff]
    %v193 = vld [vmem:[%s1 + $0xb0] sm:$0xff]
    %v194 = vld [vmem:[%s1 + $0xb8] sm:$0xff]
    %v195 = vld [vmem:[%s1 + $0xc0] sm:$0xff]
    %v196 = vld [vmem:[%s1 + $0xc8] sm:$0xff]
    %v197 = vld [vmem:[%s1 + $0xd0] sm:$0xff]
    %v198 = vld [vmem:[%s1 + $0xd8] sm:$0xff]
    %v199 = vld [vmem:[%s1 + $0xe0] sm:$0xff]
    %v200 = vld [vmem:[%s1 + $0xe8] sm:$0xff]
    %v201 = vld [vmem:[%s1 + $0xf0] sm:$0xff]
    %v202 = vld [vmem:[%s1 + $0xf8] sm:$0xff]
    %v203 = vld [vmem:[%s2] sm:$0x1]
    %v205 = vlaneseq
    %v206 = vshrl.u32 %v205, 7
    %v207 = vsub.s32 0, %v206
    %v208 = vrot.slane %v203, %v207
    %210 = vmatprep.subr.mxu0 0.0
    %211 = vmatpush1.msra.mxu0 %v171
    %212 = vmatprep.subr.mxu0 0.0
    %213 = vmatpush1.msra.mxu0 %v172
    %214 = vmatprep.subr.mxu0 0.0
    %215 = vmatpush1.msra.mxu0 %v173
    %216 = vmatprep.subr.mxu0 0.0
    %217 = vmatpush1.msra.mxu0 %v174
    %218 = vmatprep.subr.mxu0 0.0
    %219 = vmatpush1.msra.mxu0 %v175
    %220 = vmatprep.subr.mxu0 0.0
    %221 = vmatpush1.msra.mxu0 %v176
    %222 = vmatprep.subr.mxu0 0.0
    %223 = vmatpush1.msra.mxu0 %v177
    %224 = vmatprep.subr.mxu0 0.0
    %225 = vmatpush1.msra.mxu0 %v178
    %226 = vmatprep.subr.mxu0 0.0
    %227 = vmatpush1.msra.mxu0 %v179
    %228 = vmatprep.subr.mxu0 0.0
    %229 = vmatpush1.msra.mxu0 %v180
    %230 = vmatprep.subr.mxu0 0.0
    %231 = vmatpush1.msra.mxu0 %v181
    %232 = vmatprep.subr.mxu0 0.0
    %233 = vmatpush1.msra.mxu0 %v182
    %234 = vmatprep.subr.mxu0 0.0
    %235 = vmatpush1.msra.mxu0 %v183
    %236 = vmatprep.subr.mxu0 0.0
    %237 = vmatpush1.msra.mxu0 %v184
    %238 = vmatprep.subr.mxu0 0.0
    %239 = vmatpush1.msra.mxu0 %v185
    %240 = vmatprep.subr.mxu0 0.0
    %241 = vmatpush1.msra.mxu0 %v186
    %242 = vmatprep.subr.mxu0 0.0
    %243 = vmatpush1.msra.mxu0 %v187
    %244 = vmatprep.subr.mxu0 0.0
    %245 = vmatpush1.msra.mxu0 %v188
    %246 = vmatprep.subr.mxu0 0.0
    %247 = vmatpush1.msra.mxu0 %v189
    %248 = vmatprep.subr.mxu0 0.0
    %249 = vmatpush1.msra.mxu0 %v190
    %250 = vmatprep.subr.mxu0 0.0
    %251 = vmatpush1.msra.mxu0 %v191
    %252 = vmatprep.subr.mxu0 0.0
    %253 = vmatpush1.msra.mxu0 %v192
    %254 = vmatprep.subr.mxu0 0.0
    %255 = vmatpush1.msra.mxu0 %v193
    %256 = vmatprep.subr.mxu0 0.0
    %257 = vmatpush1.msra.mxu0 %v194
    %258 = vmatprep.subr.mxu0 0.0
    %259 = vmatpush1.msra.mxu0 %v195
    %260 = vmatprep.subr.mxu0 0.0
    %261 = vmatpush1.msra.mxu0 %v196
    %262 = vmatprep.subr.mxu0 0.0
    %263 = vmatpush1.msra.mxu0 %v197
    %264 = vmatprep.subr.mxu0 0.0
    %265 = vmatpush1.msra.mxu0 %v198
    %266 = vmatprep.subr.mxu0 0.0
    %267 = vmatpush1.msra.mxu0 %v199
    %268 = vmatprep.subr.mxu0 0.0
    %269 = vmatpush1.msra.mxu0 %v200
    %270 = vmatprep.subr.mxu0 0.0
    %271 = vmatpush1.msra.mxu0 %v201
    %272 = vmatprep.subr.mxu0 0.0
    %273 = vmatpush1.msra.mxu0 %v202
    %274 = vmatprep.mubr.f32.mxu0 %v156
    %275 = vmatmul.mubr.f32.gmra.mrb[0].mxu0 %v155
    %v276 = vpop.f32.mrb[0].mxu0
    %v277 = vadd.f32 %v208, %v276
    %v278 = vpop.f32.mrb[0].mxu0
    %279 = vmatprep.mubr.f32.mxu0 %v158
    %280 = vmatmul.mubr.f32.gmra.mrb[0].mxu0 %v157
    %v281 = vpop.f32.mrb[0].mxu0
    %v282 = vadd.f32 %v208, %v281
    %v283 = vpop.f32.mrb[0].mxu0
    %284 = vmatprep.mubr.f32.mxu0 %v160
    %285 = vmatmul.mubr.f32.gmra.mrb[0].mxu0 %v159
    %v286 = vpop.f32.mrb[0].mxu0
    %v287 = vadd.f32 %v208, %v286
    %v288 = vpop.f32.mrb[0].mxu0
    %289 = vmatprep.mubr.f32.mxu0 %v162
    %290 = vmatmul.mubr.f32.gmra.mrb[0].mxu0 %v161
    %v291 = vpop.f32.mrb[0].mxu0
    %v292 = vadd.f32 %v208, %v291
    %v293 = vpop.f32.mrb[0].mxu0
    %294 = vmatprep.mubr.f32.mxu0 %v164
    %295 = vmatmul.mubr.f32.gmra.mrb[0].mxu0 %v163
    %v296 = vpop.f32.mrb[0].mxu0
    %v297 = vadd.f32 %v208, %v296
    %v298 = vpop.f32.mrb[0].mxu0
    %299 = vmatprep.mubr.f32.mxu0 %v166
    %300 = vmatmul.mubr.f32.gmra.mrb[0].mxu0 %v165
    %v301 = vpop.f32.mrb[0].mxu0
    %v302 = vadd.f32 %v208, %v301
    %v303 = vpop.f32.mrb[0].mxu0
    %304 = vmatprep.mubr.f32.mxu0 %v168
    %305 = vmatmul.mubr.f32.gmra.mrb[0].mxu0 %v167
    %v306 = vpop.f32.mrb[0].mxu0
    %v307 = vadd.f32 %v208, %v306
    %v308 = vpop.f32.mrb[0].mxu0
    %309 = vmatprep.mubr.f32.mxu0 %v170
    %310 = vmatmul.mubr.f32.gmra.mrb[0].mxu0 %v169
    %v311 = vpop.f32.mrb[0].mxu0
    %v312 = vadd.f32 %v208, %v311
    %v313 = vpop.f32.mrb[0].mxu0
    %314 = vdwg.mxu0
    %v315 = vmax.f32 %v277, 0.0
    %v316 = vmax.f32 %v282, 0.0
    %v317 = vmax.f32 %v287, 0.0
    %v318 = vmax.f32 %v292, 0.0
    %v319 = vmax.f32 %v297, 0.0
    %v320 = vmax.f32 %v302, 0.0
    %v321 = vmax.f32 %v307, 0.0
    %v322 = vmax.f32 %v312, 0.0
    %v323 = vld [vmem:[%s4] sm:$0x3]
    %v324 = vld [vmem:[%s3] sm:$0xff]
    %v325 = vld [vmem:[%s3 + $0x8] sm:$0xff]
    %v326 = vld [vmem:[%s3 + $0x10] sm:$0xff]
    %v327 = vld [vmem:[%s3 + $0x18] sm:$0xff]
    %v328 = vld [vmem:[%s3 + $0x20] sm:$0xff]
    %v329 = vld [vmem:[%s3 + $0x28] sm:$0xff]
    %v330 = vld [vmem:[%s3 + $0x30] sm:$0xff]
    %v331 = vld [vmem:[%s3 + $0x38] sm:$0xf]
    %v332 = vmul.f32 %v315, %v324
    %v333 = vmul.f32 %v316, %v325
    %v334 = vmul.f32 %v317, %v326
    %v335 = vmul.f32 %v318, %v327
    %v336 = vmul.f32 %v319, %v328
    %v337 = vmul.f32 %v320, %v329
    %v338 = vmul.f32 %v321, %v330
    %v339 = vmul.f32 %v322, %v331
    %vm340 = vcmask 490496
    %v342 = vsel %vm340, %v323, 0
    %vm344 = vcmask 1043456
    %v346 = vsel %vm344, %v339, 0
    %348 = vmatprep.subr.mxu0 0.0
    %349 = vmatpush1.msra.mxu0 %v332
    %350 = vmatprep.subr.mxu0 0.0
    %351 = vmatpush1.msra.mxu0 %v333
    %352 = vmatprep.subr.mxu0 0.0
    %353 = vmatpush1.msra.mxu0 %v334
    %354 = vmatprep.subr.mxu0 0.0
    %355 = vmatpush1.msra.mxu0 %v335
    %356 = vmatprep.subr.mxu0 0.0
    %357 = vmatpush1.msra.mxu0 %v336
    %358 = vmatprep.subr.mxu0 0.0
    %359 = vmatpush1.msra.mxu0 %v337
    %360 = vmatprep.subr.mxu0 0.0
    %361 = vmatpush1.msra.mxu0 %v338
    %362 = vmatprep.subr.mxu0 0.0
    %363 = vmatpush1.msra.mxu0 %v346
    %364 = vmatprep.subr.mxu0 0.0
    %365 = vmatpush1.msra.mxu0 0.0
    %366 = vmatprep.subr.mxu0 0.0
    %367 = vmatpush1.msra.mxu0 0.0
    %368 = vmatprep.subr.mxu0 0.0
    %369 = vmatpush1.msra.mxu0 0.0
    %370 = vmatprep.subr.mxu0 0.0
    %371 = vmatpush1.msra.mxu0 0.0
    %372 = vmatprep.subr.mxu0 0.0
    %373 = vmatpush1.msra.mxu0 0.0
    %374 = vmatprep.subr.mxu0 0.0
    %375 = vmatpush1.msra.mxu0 0.0
    %376 = vmatprep.subr.mxu0 0.0
    %377 = vmatpush1.msra.mxu0 0.0
    %378 = vmatprep.subr.mxu0 0.0
    %379 = vmatpush1.msra.mxu0 0.0
    %380 = vmatprep.subr.mxu0 0.0
    %381 = vmatpush1.msra.mxu0 0.0
    %382 = vmatprep.subr.mxu0 0.0
    %383 = vmatpush1.msra.mxu0 0.0
    %384 = vmatprep.subr.mxu0 0.0
    %385 = vmatpush1.msra.mxu0 0.0
    %386 = vmatprep.subr.mxu0 0.0
    %387 = vmatpush1.msra.mxu0 0.0
    %388 = vmatprep.subr.mxu0 0.0
    %389 = vmatpush1.msra.mxu0 0.0
    %390 = vmatprep.subr.mxu0 0.0
    %391 = vmatpush1.msra.mxu0 0.0
    %392 = vmatprep.subr.mxu0 0.0
    %393 = vmatpush1.msra.mxu0 0.0
    %394 = vmatprep.subr.mxu0 0.0
    %395 = vmatpush1.msra.mxu0 0.0
    %396 = vmatprep.subr.mxu0 0.0
    %397 = vmatpush1.msra.mxu0 0.0
    %398 = vmatprep.subr.mxu0 0.0
    %399 = vmatpush1.msra.mxu0 0.0
    %400 = vmatprep.subr.mxu0 0.0
    %401 = vmatpush1.msra.mxu0 0.0
    %402 = vmatprep.subr.mxu0 0.0
    %403 = vmatpush1.msra.mxu0 0.0
    %404 = vmatprep.subr.mxu0 0.0
    %405 = vmatpush1.msra.mxu0 0.0
    %406 = vmatprep.subr.mxu0 0.0
    %407 = vmatpush1.msra.mxu0 0.0
    %408 = vmatprep.subr.mxu0 0.0
    %409 = vmatpush1.msra.mxu0 0.0
    %410 = vmatprep.subr.mxu0 0.0
    %411 = vmatpush1.msra.mxu0 0.0
    %412 = vmatprep.mubr.f32.mxu0 0.0
    %413 = vmatmul.mubr.f32.gmra.mrb[0].mxu0 %v342
    %v414 = vpop.f32.mrb[0].mxu0
    %v415 = vadd.f32 0.0, %v414
    %v416 = vpop.f32.mrb[0].mxu0
    %417 = vdwg.mxu0
    %vm418 = vcmask 517120
    %v419 = vsel %vm418, %v415, 0.0
    %420 = vadd.xlane.f32.xlu0 %v419
    %v421 = vpop.xlane.xlu0 %420
    %s422 = scalar_lea.vmem %s3, 64
    %v423 = vld [vmem:[%s422] sm:$0xff]
    %v424 = vld [vmem:[%s422 + $0x8] sm:$0xff]
    %v425 = vld [vmem:[%s422 + $0x10] sm:$0xff]
    %v426 = vld [vmem:[%s422 + $0x18] sm:$0xff]
    %v427 = vld [vmem:[%s422 + $0x20] sm:$0xff]
    %v428 = vld [vmem:[%s422 + $0x28] sm:$0xff]
    %v429 = vld [vmem:[%s422 + $0x30] sm:$0xff]
    %v430 = vld [vmem:[%s422 + $0x38] sm:$0xf]
    %v431 = vmul.f32 %v315, %v423
    %v432 = vmul.f32 %v316, %v424
    %v433 = vmul.f32 %v317, %v425
    %v434 = vmul.f32 %v318, %v426
    %v435 = vmul.f32 %v319, %v427
    %v436 = vmul.f32 %v320, %v428
    %v437 = vmul.f32 %v321, %v429
    %v438 = vmul.f32 %v322, %v430
    %v440 = vsel %vm344, %v438, 0
    %442 = vmatprep.subr.mxu0 0.0
    %443 = vmatpush1.msra.mxu0 %v431
    %444 = vmatprep.subr.mxu0 0.0
    %445 = vmatpush1.msra.mxu0 %v432
    %446 = vmatprep.subr.mxu0 0.0
    %447 = vmatpush1.msra.mxu0 %v433
    %448 = vmatprep.subr.mxu0 0.0
    %449 = vmatpush1.msra.mxu0 %v434
    %450 = vmatprep.subr.mxu0 0.0
    %451 = vmatpush1.msra.mxu0 %v435
    %452 = vmatprep.subr.mxu0 0.0
    %453 = vmatpush1.msra.mxu0 %v436
    %454 = vmatprep.subr.mxu0 0.0
    %455 = vmatpush1.msra.mxu0 %v437
    %456 = vmatprep.subr.mxu0 0.0
    %457 = vmatpush1.msra.mxu0 %v440
    %458 = vmatprep.subr.mxu0 0.0
    %459 = vmatpush1.msra.mxu0 0.0
    %460 = vmatprep.subr.mxu0 0.0
    %461 = vmatpush1.msra.mxu0 0.0
    %462 = vmatprep.subr.mxu0 0.0
    %463 = vmatpush1.msra.mxu0 0.0
    %464 = vmatprep.subr.mxu0 0.0
    %465 = vmatpush1.msra.mxu0 0.0
    %466 = vmatprep.subr.mxu0 0.0
    %467 = vmatpush1.msra.mxu0 0.0
    %468 = vmatprep.subr.mxu0 0.0
    %469 = vmatpush1.msra.mxu0 0.0
    %470 = vmatprep.subr.mxu0 0.0
    %471 = vmatpush1.msra.mxu0 0.0
    %472 = vmatprep.subr.mxu0 0.0
    %473 = vmatpush1.msra.mxu0 0.0
    %474 = vmatprep.subr.mxu0 0.0
    %475 = vmatpush1.msra.mxu0 0.0
    %476 = vmatprep.subr.mxu0 0.0
    %477 = vmatpush1.msra.mxu0 0.0
    %478 = vmatprep.subr.mxu0 0.0
    %479 = vmatpush1.msra.mxu0 0.0
    %480 = vmatprep.subr.mxu0 0.0
    %481 = vmatpush1.msra.mxu0 0.0
    %482 = vmatprep.subr.mxu0 0.0
    %483 = vmatpush1.msra.mxu0 0.0
    %484 = vmatprep.subr.mxu0 0.0
    %485 = vmatpush1.msra.mxu0 0.0
    %486 = vmatprep.subr.mxu0 0.0
    %487 = vmatpush1.msra.mxu0 0.0
    %488 = vmatprep.subr.mxu0 0.0
    %489 = vmatpush1.msra.mxu0 0.0
    %490 = vmatprep.subr.mxu0 0.0
    %491 = vmatpush1.msra.mxu0 0.0
    %492 = vmatprep.subr.mxu0 0.0
    %493 = vmatpush1.msra.mxu0 0.0
    %494 = vmatprep.subr.mxu0 0.0
    %495 = vmatpush1.msra.mxu0 0.0
    %496 = vmatprep.subr.mxu0 0.0
    %497 = vmatpush1.msra.mxu0 0.0
    %498 = vmatprep.subr.mxu0 0.0
    %499 = vmatpush1.msra.mxu0 0.0
    %500 = vmatprep.subr.mxu0 0.0
    %501 = vmatpush1.msra.mxu0 0.0
    %502 = vmatprep.subr.mxu0 0.0
    %503 = vmatpush1.msra.mxu0 0.0
    %504 = vmatprep.subr.mxu0 0.0
    %505 = vmatpush1.msra.mxu0 0.0
    %506 = vmatprep.mubr.f32.mxu0 0.0
    %507 = vmatmul.mubr.f32.gmra.mrb[0].mxu0 %v342
    %v508 = vpop.f32.mrb[0].mxu0
    %v509 = vadd.f32 0.0, %v508
    %v510 = vpop.f32.mrb[0].mxu0
    %511 = vdwg.mxu0
    %v512 = vsel %vm418, %v509, 0.0
    %513 = vadd.xlane.f32.xlu0 %v512
    %v514 = vpop.xlane.xlu0 %513
    %vm515 = vcmask 7168
    %v516 = vsel %vm515, %v421, %v514
    %v517 = vld [vmem:[%s5] sm:$0x1]
    %v519 = vlaneseq
    %v520 = vshrl.u32 %v519, 7
    %v521 = vsub.s32 0, %v520
    %v522 = vrot.slane %v517, %v521
    %v524 = vadd.f32 %v516, %v522
    %vm525 = vcmask 9216
    %526 = vst.msk [vmem:[#allocation2] sm:$0x3] %vm525, %v524
    // Predicated region
    $region26: #{target_fm2_forward.1} parent=1 // pred_check
      _
    $region27: #{target_fm2_forward.1} parent=1 // pred_check_branch
      %528 = sbr.rel (0) target = $region29
    $region28: #{target_fm2_forward.1} parent=1 // pred_region
      %s530 = ssub.s32 32, 32
      %531 = vsyncadd [#allocation3], %s530
      %s533 = sshll.u32 [#allocation2], 4
      %s534 = int_to_ptr.vmem [resolvable:$true] %s533
      %536 = dma.vmem_to_hbm [thread:$0]  %s534, 32, %s6, [#allocation3]
    $region29: #{target_fm2_forward.1} parent=1 // pred_fallthru
      _
    // Predicated region
    $region30: #{target_fm2_forward.1} parent=1 // pred_check
      _
    $region31: #{target_fm2_forward.1} parent=1 // pred_check_branch
      %538 = sbr.rel (0) target = $region33
    $region32: #{target_fm2_forward.1} parent=1 // pred_region
      %539 = dma.done [#allocation3], 32
    $region33: #{target_fm2_forward.1} parent=1 // pred_fallthru
      _
    %540 = vsyncpa [#allocation3], 1

</llo_original>
